<compile_context>
chip_gen: v5e
topology: v5e:2x2
jax: 0.10.0
libtpu: 0.0.40
codegen_flags: <defaults>
</compile_context>

<pallas_src>
import functools
import math

import jax
import jax.numpy as jnp
from jax import lax
from jax.experimental import pallas as pl
from jax.experimental.pallas import tpu as pltpu

EPS = 1e-6
LANES = 128


def _round_up(x, n):
    return ((x + n - 1) // n) * n


def _acos_f32(x):
    """float32-accurate acos using only sqrt/mul/add/where (Pallas-TPU safe).

    Abramowitz & Stegun 4.4.46 polynomial, |abs err| <= 2e-8 on [-1, 1], below
    float32 roundoff for acos.  The polynomial is VALU filler (kernel is
    memory-bound); sqrt goes to the EUP slot.
    """
    # TODO(synk): use jnp.arccos directly if/when Mosaic guarantees an acos lowering.
    a = jnp.abs(x)
    p = jnp.float32(-0.0012624911)
    p = p * a + jnp.float32(0.0066700901)
    p = p * a + jnp.float32(-0.0170881256)
    p = p * a + jnp.float32(0.0308918810)
    p = p * a + jnp.float32(-0.0501743046)
    p = p * a + jnp.float32(0.0889789874)
    p = p * a + jnp.float32(-0.2145988016)
    p = p * a + jnp.float32(1.5707963050)
    r = p * jnp.sqrt(jnp.float32(1.0) - a)
    return jnp.where(x < 0, jnp.float32(math.pi) - r, r)


def _tile_theta(x_ref, y_ref):
    """Per-column geodesic angle for one (9, tile_n) tile of transposed matrices."""
    x = x_ref[...].astype(jnp.float32)          # bf16 inputs up-cast after the load
    y = y_ref[...].astype(jnp.float32)
    # trace(m1 @ m2^T) == elementwise dot of the two flattened 3x3 matrices.
    trace = jnp.sum(x * y, axis=0, keepdims=True)            # (1, tile_n)
    cos = (trace - jnp.float32(1.0)) * jnp.float32(0.5)
    cos = jnp.minimum(cos, jnp.float32(1.0 - EPS))            # torch.min(cos, 1 - eps)
    cos = jnp.maximum(cos, jnp.float32(-1.0 + EPS))           # torch.max(cos, -1 + eps)
    return _acos_f32(cos)                                     # (1, tile_n)


def _theta_kernel(x_ref, y_ref, theta_ref):
    """reduction='none': lane-dense per-matrix angles."""
    theta_ref[...] = _tile_theta(x_ref, y_ref)


def _partial_sum_kernel(x_ref, y_ref, out_ref, *, valid_m, tile_n):
    """reduction='mean'/'batchmean': masked per-tile partial sum, lane-dense store."""
    theta = _tile_theta(x_ref, y_ref)                          # (1, tile_n)
    col = pl.program_id(0) * tile_n + lax.broadcasted_iota(
        jnp.int32, (1, tile_n), 1)
    theta = jnp.where(col < valid_m, theta, jnp.float32(0.0))  # mask pad / ragged tail
    partial = jnp.sum(theta, axis=1, keepdims=True)            # (1, 1) lane reduce (XLU)
    out_ref[...] = jnp.broadcast_to(partial, (1, LANES))       # unmasked (1,128) store


@functools.partial(jax.jit,
                   static_argnames=("reduction", "max_tile_n", "input_buffering"))
def geodesic_loss(ypred, ytrue, reduction="batchmean",
                  max_tile_n=32768, input_buffering=2):
    assert ypred.shape == ytrue.shape
    m1 = ypred.reshape(-1, 9)
    m2 = ytrue.reshape(-1, 9)
    # Keep f32/bf16 over HBM (bf16 halves the dominant read); anything else -> f32.
    if m1.dtype not in (jnp.float32, jnp.bfloat16):
        m1 = m1.astype(jnp.float32)
        m2 = m2.astype(jnp.float32)
    m = m1.shape[0]

    # Pad only to the 128-lane tile; ragged last grid block is masked in-kernel.
    m_pad = _round_up(m, LANES)
    tile_n = min(_round_up(max_tile_n, LANES), m_pad)
    grid = (m_pad + tile_n - 1) // tile_n

    # Transposed packed layout (9, m_pad): column n = n-th flattened 3x3 matrix.
    # TODO(synk): for best end-to-end perf keep rotations in this layout upstream.
    x = jnp.pad(m1, ((0, m_pad - m), (0, 0))).T
    y = jnp.pad(m2, ((0, m_pad - m), (0, 0))).T

    def _in_spec():
        if input_buffering > 2 and hasattr(pl, "Buffered"):
            # v7x: deeper input pipelining to hide DMA issue / step overhead.
            return pl.BlockSpec((9, tile_n), lambda i: (0, i),
                                pipeline_mode=pl.Buffered(input_buffering))
        return pl.BlockSpec((9, tile_n), lambda i: (0, i))

    reduced = reduction in ("mean", "batchmean")

    # Scoped-VMEM budget: 9 rows pad to 16 sublanes per input buffer; make sure
    # large tiles also fit v5e's 16 MiB default scoped limit.
    itemsize = jnp.dtype(m1.dtype).itemsize
    bufs = max(2, input_buffering)
    in_bytes = 2 * bufs * 16 * tile_n * itemsize
    out_bytes = 2 * 8 * (LANES if reduced else tile_n) * 4
    vmem_limit = int(max(32 << 20, in_bytes + out_bytes + (8 << 20)))

    compiler_params = pltpu.CompilerParams(
        dimension_semantics=("parallel",),          # no cross-step state
        vmem_limit_bytes=vmem_limit,
        allow_input_fusion=[True, True],            # fuse pad+transpose into operands
    )

    if reduced:
        kernel = functools.partial(_partial_sum_kernel, valid_m=m, tile_n=tile_n)
        partials = pl.pallas_call(
            kernel,
            out_shape=jax.ShapeDtypeStruct((1, LANES * grid), jnp.float32),
            grid_spec=pltpu.PrefetchScalarGridSpec(
                num_scalar_prefetch=0,
                grid=(grid,),
                in_specs=[_in_spec(), _in_spec()],
                out_specs=pl.BlockSpec((1, LANES), lambda i: (0, i)),
            ),
            compiler_params=compiler_params,
        )(x, y)
        total = jnp.sum(partials[0, ::LANES])       # one value per tile
        if reduction == "mean":
            return total / jnp.float32(m)
        return total  # 'batchmean': torch.sum(theta, dim=()) quirk -> sum

    theta = pl.pallas_call(
        _theta_kernel,
        out_shape=jax.ShapeDtypeStruct((1, m_pad), jnp.float32),
        grid_spec=pltpu.PrefetchScalarGridSpec(
            num_scalar_prefetch=0,
            grid=(grid,),
            in_specs=[_in_spec(), _in_spec()],
            out_specs=pl.BlockSpec((1, tile_n), lambda i: (0, i)),
        ),
        compiler_params=compiler_params,
    )(x, y)
    return theta[0, :m]


def geodesic_loss_reference(ypred, ytrue, reduction="batchmean"):
    """Pure-JAX reference mirroring the PyTorch module."""
    m1 = ypred.reshape(-1, 3, 3).astype(jnp.float32)
    m2 = ytrue.reshape(-1, 3, 3).astype(jnp.float32)
    mm = jnp.einsum("bij,bkj->bik", m1, m2)                    # m1 @ m2^T
    cos = (mm[:, 0, 0] + mm[:, 1, 1] + mm[:, 2, 2] - 1.0) / 2.0
    cos = jnp.minimum(cos, 1.0 - EPS)
    cos = jnp.maximum(cos, -1.0 + EPS)
    theta = jnp.arccos(cos)
    if reduction == "mean":
        return jnp.mean(theta)
    if reduction == "batchmean":
        return jnp.sum(theta)                                  # torch dim=() quirk
    return theta


if __name__ == "__main__":
    key = jax.random.PRNGKey(0)
    k1, k2 = jax.random.split(key)
    # batch=2, seq=8 rotation predictions -> 16 flattened 3x3 matrices.
    ypred = jax.random.normal(k1, (2, 8, 3, 3), dtype=jnp.float32) * 0.5
    ytrue = jax.random.normal(k2, (2, 8, 3, 3), dtype=jnp.float32) * 0.5

    # 'batchmean' (default): fused in-kernel partial sums.
    out = jax.block_until_ready(geodesic_loss(ypred, ytrue, reduction="batchmean"))
    ref = geodesic_loss_reference(ypred, ytrue, reduction="batchmean")
    assert jnp.allclose(out, ref, rtol=1e-5, atol=1e-4), (out, ref)

    # 'mean' reduction path.
    mean_k = jax.block_until_ready(geodesic_loss(ypred, ytrue, reduction="mean"))
    mean_r = geodesic_loss_reference(ypred, ytrue, reduction="mean")
    assert jnp.allclose(mean_k, mean_r, rtol=1e-5, atol=1e-4), (mean_k, mean_r)

    # Un-reduced path (lane-dense theta output).
    theta_k = jax.block_until_ready(geodesic_loss(ypred, ytrue, reduction="none"))
    theta_r = geodesic_loss_reference(ypred, ytrue, reduction="none")
    assert theta_k.shape == theta_r.shape
    assert jnp.allclose(theta_k, theta_r, rtol=1e-5, atol=1e-4)

    # bf16 inputs stay bf16 over HBM (halved read); f32 math inside the kernel.
    yp_bf, yt_bf = ypred.astype(jnp.bfloat16), ytrue.astype(jnp.bfloat16)
    out_bf = jax.block_until_ready(geodesic_loss(yp_bf, yt_bf, reduction="batchmean"))
    ref_bf = geodesic_loss_reference(yp_bf, yt_bf, reduction="batchmean")
    assert jnp.allclose(out_bf, ref_bf, rtol=1e-4, atol=1e-3), (out_bf, ref_bf)

    # Multi-tile grid + ragged last block + in-kernel tail masking:
    # m=300 -> m_pad=384, tile_n=256, grid=2 (last block overruns the array).
    k3, k4 = jax.random.split(jax.random.PRNGKey(0))
    yp2 = jax.random.normal(k3, (300, 3, 3), dtype=jnp.float32) * 0.5
    yt2 = jax.random.normal(k4, (300, 3, 3), dtype=jnp.float32) * 0.5
    out2 = jax.block_until_ready(
        geodesic_loss(yp2, yt2, reduction="batchmean", max_tile_n=256))
    ref2 = geodesic_loss_reference(yp2, yt2, reduction="batchmean")
    assert jnp.allclose(out2, ref2, rtol=1e-4, atol=1e-3), (out2, ref2)

    print("KERNEL_OK")
</pallas_src>

<mosaic_0001>
module attributes {stable_mosaic.version = 11 : i64} {
  func.func @_partial_sum_kernel(%arg0: i32, %arg1: memref<9x128xf32, #tpu.memory_space<vmem>>, %arg2: memref<9x128xf32, #tpu.memory_space<vmem>>, %arg3: memref<1x128xf32, #tpu.memory_space<vmem>>) attributes {dimension_semantics = [#tpu.dimension_semantics<parallel>], iteration_bounds = array<i64: 1>, scalar_prefetch = 0 : i64, scratch_operands = 0 : i64, tpu.core_type = #tpu.core_type<tc>, window_params = [{transform_indices = @transform_0, window_bounds = array<i64: 9, 128>}, {transform_indices = @transform_1, window_bounds = array<i64: 9, 128>}, {transform_indices = @transform_2, window_bounds = array<i64: 1, 128>}]} {
    %c0 = arith.constant 0 : index
    %c0_0 = arith.constant 0 : index
    %0 = vector.load %arg1[%c0, %c0_0] : memref<9x128xf32, #tpu.memory_space<vmem>>, vector<9x128xf32>
    %c0_1 = arith.constant 0 : index
    %c0_2 = arith.constant 0 : index
    %1 = vector.load %arg2[%c0_1, %c0_2] : memref<9x128xf32, #tpu.memory_space<vmem>>, vector<9x128xf32>
    %2 = arith.mulf %0, %1 : vector<9x128xf32>
    %cst = arith.constant dense<0.000000e+00> : vector<128xf32>
    %3 = vector.multi_reduction <add>, %2, %cst [0] : vector<9x128xf32> to vector<128xf32>
    %4 = vector.shape_cast %3 : vector<128xf32> to vector<1x128xf32>
    %cst_3 = arith.constant 1.000000e+00 : f32
    %5 = vector.broadcast %cst_3 : f32 to vector<1x128xf32>
    %6 = arith.subf %4, %5 : vector<1x128xf32>
    %cst_4 = arith.constant 5.000000e-01 : f32
    %7 = vector.broadcast %cst_4 : f32 to vector<1x128xf32>
    %8 = arith.mulf %6, %7 : vector<1x128xf32>
    %cst_5 = arith.constant 0.999998986 : f32
    %9 = vector.broadcast %cst_5 : f32 to vector<1x128xf32>
    %10 = arith.minimumf %8, %9 : vector<1x128xf32>
    %cst_6 = arith.constant -0.999998986 : f32
    %11 = vector.broadcast %cst_6 : f32 to vector<1x128xf32>
    %12 = arith.maximumf %10, %11 : vector<1x128xf32>
    %13 = math.absf %12 : vector<1x128xf32>
    %cst_7 = arith.constant -0.0012624911 : f32
    %14 = vector.broadcast %cst_7 : f32 to vector<1x128xf32>
    %15 = arith.mulf %14, %13 : vector<1x128xf32>
    %cst_8 = arith.constant 6.670090e-03 : f32
    %16 = vector.broadcast %cst_8 : f32 to vector<1x128xf32>
    %17 = arith.addf %15, %16 : vector<1x128xf32>
    %18 = arith.mulf %17, %13 : vector<1x128xf32>
    %cst_9 = arith.constant -0.0170881264 : f32
    %19 = vector.broadcast %cst_9 : f32 to vector<1x128xf32>
    %20 = arith.addf %18, %19 : vector<1x128xf32>
    %21 = arith.mulf %20, %13 : vector<1x128xf32>
    %cst_10 = arith.constant 0.0308918804 : f32
    %22 = vector.broadcast %cst_10 : f32 to vector<1x128xf32>
    %23 = arith.addf %21, %22 : vector<1x128xf32>
    %24 = arith.mulf %23, %13 : vector<1x128xf32>
    %cst_11 = arith.constant -0.0501743034 : f32
    %25 = vector.broadcast %cst_11 : f32 to vector<1x128xf32>
    %26 = arith.addf %24, %25 : vector<1x128xf32>
    %27 = arith.mulf %26, %13 : vector<1x128xf32>
    %cst_12 = arith.constant 0.0889789909 : f32
    %28 = vector.broadcast %cst_12 : f32 to vector<1x128xf32>
    %29 = arith.addf %27, %28 : vector<1x128xf32>
    %30 = arith.mulf %29, %13 : vector<1x128xf32>
    %cst_13 = arith.constant -0.214598805 : f32
    %31 = vector.broadcast %cst_13 : f32 to vector<1x128xf32>
    %32 = arith.addf %30, %31 : vector<1x128xf32>
    %33 = arith.mulf %32, %13 : vector<1x128xf32>
    %cst_14 = arith.constant 1.57079625 : f32
    %34 = vector.broadcast %cst_14 : f32 to vector<1x128xf32>
    %35 = arith.addf %33, %34 : vector<1x128xf32>
    %cst_15 = arith.constant 1.000000e+00 : f32
    %36 = vector.broadcast %cst_15 : f32 to vector<1x128xf32>
    %37 = arith.subf %36, %13 : vector<1x128xf32>
    %38 = math.sqrt %37 : vector<1x128xf32>
    %39 = arith.mulf %35, %38 : vector<1x128xf32>
    %cst_16 = arith.constant 0.000000e+00 : f32
    %40 = vector.broadcast %cst_16 : f32 to vector<1x128xf32>
    %41 = arith.cmpf olt, %12, %40 : vector<1x128xf32>
    %cst_17 = arith.constant 3.14159274 : f32
    %42 = vector.broadcast %cst_17 : f32 to vector<1x128xf32>
    %43 = arith.subf %42, %39 : vector<1x128xf32>
    %44 = arith.select %41, %43, %39 : vector<1x128xi1>, vector<1x128xf32>
    %c128_i32 = arith.constant 128 : i32
    %45 = arith.muli %arg0, %c128_i32 : i32
    %46 = tpu.iota {dimensions = array<i32: 1>} : vector<1x128xi32>
    %47 = vector.broadcast %45 : i32 to vector<1x128xi32>
    %48 = arith.addi %47, %46 : vector<1x128xi32>
    %c16_i32 = arith.constant 16 : i32
    %49 = vector.broadcast %c16_i32 : i32 to vector<1x128xi32>
    %50 = arith.cmpi slt, %48, %49 : vector<1x128xi32>
    %cst_18 = arith.constant 0.000000e+00 : f32
    %51 = vector.broadcast %cst_18 : f32 to vector<1x128xf32>
    %52 = arith.select %50, %44, %51 : vector<1x128xi1>, vector<1x128xf32>
    %cst_19 = arith.constant dense<0.000000e+00> : vector<1xf32>
    %53 = vector.multi_reduction <add>, %52, %cst_19 [1] : vector<1x128xf32> to vector<1xf32>
    %54 = vector.shape_cast %53 : vector<1xf32> to vector<1x1xf32>
    %55 = vector.shape_cast %54 : vector<1x1xf32> to vector<1x1xf32>
    %56 = vector.broadcast %55 : vector<1x1xf32> to vector<1x128xf32>
    %c0_20 = arith.constant 0 : index
    %c0_21 = arith.constant 0 : index
    %57 = vector.load %arg3[%c0_20, %c0_21] : memref<1x128xf32, #tpu.memory_space<vmem>>, vector<1x128xf32>
    tpu.vector_store %arg3[%c0_20, %c0_21], %56 {strides = array<i32>} : memref<1x128xf32, #tpu.memory_space<vmem>>, vector<1x128xf32>,
    return
  }
  func.func @transform_0(%arg0: i32) -> (i32, i32) {
    %c0_i32 = arith.constant 0 : i32
    %c0_i32_0 = arith.constant 0 : i32
    return %c0_i32, %arg0 : i32, i32
  }
  func.func @transform_1(%arg0: i32) -> (i32, i32) {
    %c0_i32 = arith.constant 0 : i32
    %c0_i32_0 = arith.constant 0 : i32
    return %c0_i32, %arg0 : i32, i32
  }
  func.func @transform_2(%arg0: i32) -> (i32, i32) {
    %c0_i32 = arith.constant 0 : i32
    %c0_i32_0 = arith.constant 0 : i32
    return %c0_i32, %arg0 : i32, i32
  }
}

</mosaic_0001>

<llo_original>
// kernel: geodesic_loss.2
$region0: #{geodesic_loss.2}
  #allocation0 [shape = 'u32[]', space=smem, size = 0x4, offset = 0x4, fixed_abs, tag = 'smem constant byte address 0x4 - core index']
  #allocation1 [shape = 'u32[72,128]{1,0:T(1,128)}', space=vmem, size = 0x9000, scoped, tag = 'internal scratch']
  #allocation2 [shape = 'u32[2048]{0}', space=vmem, size = 0x2000, scoped, tag = 'scoped memory for geodesic_loss.2']
  #allocation3 [shape = 'u32[2048]{0}', space=vmem, size = 0x2000, scoped, tag = 'scoped memory for geodesic_loss.2']
  #allocation4 [shape = 'u32[2048]{0}', space=vmem, size = 0x2000, scoped, tag = 'scoped memory for geodesic_loss.2']
  #allocation5 [shape = 'u32[2048]{0}', space=vmem, size = 0x2000, scoped, tag = 'scoped memory for geodesic_loss.2']
  #allocation6 [shape = 'u32[2048]{0}', space=vmem, size = 0x2000, scoped, tag = 'scoped memory for geodesic_loss.2']
  #allocation7 [shape = 'u32[2048]{0}', space=vmem, size = 0x2000, scoped, tag = 'scoped memory for geodesic_loss.2']
  #allocation8 [shape = 'u32[2048]{0}', space=vmem, size = 0x2000, scoped, tag = 'scoped memory for geodesic_loss.2']
  #allocation9 [shape = 'u32[2048]{0}', space=vmem, size = 0x2000, scoped, tag = 'scoped memory for geodesic_loss.2']
  #allocation10 [shape = 'u32[2048]{0}', space=vmem, size = 0x2000, scoped, tag = 'scoped memory for geodesic_loss.2']
  #allocation11 [shape = 'u32[2048]{0}', space=vmem, size = 0x2000, scoped, tag = 'scoped memory for geodesic_loss.2']
  %s0 = inlined_call_operand.vmem [shape: f32[16,9], index: 0, kind: input, shape index: {}]
  %s1 = inlined_call_operand.<no memory space> [shape: f32[], index: 1, kind: input, shape index: {}]
  %s2 = inlined_call_operand.vmem [shape: f32[16,9], index: 2, kind: input, shape index: {}]
  %s3 = inlined_call_operand.hbm [shape: f32[1,128], index: 3, kind: output, shape index: {}]
  %s4 = sld [smem:[#allocation0]]
  $region18: #{geodesic_loss.2} parent=0
    _
  %s6 = ssub.s32 1, %s4
  %s7 = scalar_select 0, %s6, %s4
  %v8 = vstv %s1
  %v9 = vstv %s1
  $region1: #{geodesic_loss.2} parent=0
    #allocation12 [shape = 'u8[512]{0}', space=vmem, size = 0x400, scoped, tag = 'output window, operand 0, single buffered']
    #allocation13 [shape = 's32[1]{0}', space=sflag, size = 0x4, scoped, tag = 'scoped memory for geodesic_loss.2']
    #allocation14 [shape = 'u8[8192]{0}', space=vmem, size = 0x2000, dematerialized = true, scoped, tag = 'FusionAdapter Buffer %fusion.2 = f32[9,128]{1,0:T(8,128)} fusion(%param_2.1, %param_1.7), kind=kLoop, calls=%fused_computation.2.clone, metadata={op_name="jit(geodesic_loss)/transpose" stack_frame_id=11}']
    #allocation15 [shape = 'u8[8192]{0}', space=vmem, size = 0x2000, dematerialized = true, scoped, tag = 'FusionAdapter Buffer %fusion.1 = f32[9,128]{1,0:T(8,128)} fusion(%param_0.8, %param_1.7), kind=kLoop, calls=%fused_computation.1.clone, metadata={op_name="jit(geodesic_loss)/transpose" stack_frame_id=13}']
    %10 = vsyncpa [#allocation13], 0
    // Predicated region
    $region2: #{geodesic_loss.2} parent=1 // pred_check
      _
    $region3: #{geodesic_loss.2} parent=1 // pred_check_branch
      %12 = sbr.rel (0) target = $region5
    $region4: #{geodesic_loss.2} parent=1 // pred_region
      _
    $region5: #{geodesic_loss.2} parent=1 // pred_fallthru
      _
    // Predicated region
    $region6: #{geodesic_loss.2} parent=1 // pred_check
      _
    $region7: #{geodesic_loss.2} parent=1 // pred_check_branch
      %14 = sbr.rel (0) target = $region9
    $region8: #{geodesic_loss.2} parent=1 // pred_region
      _
    $region9: #{geodesic_loss.2} parent=1 // pred_fallthru
      _
    %v15 = vld [vmem:[%s2] sm:$0xff]
    %v16 = vlaneseq
    %v17 = vshrl.u32 %v16, 7
    %vm19 = vcmp.lt.s32.totalorder %v17, 9
    %v20 = vsel %vm19, %v15, %v8
    %v21 = vlaneseq
    %v22 = vand.u32 %v21, 127
    %vm24 = vcmp.lt.s32.totalorder %v22, 16
    %v25 = vsel %vm24, %v20, %v8
    %s27 = ssub.s32 256, 1
    %28 = vst [vmem:[#allocation14] sm:%s27] %v25
    %s29 = scalar_lea.vmem %s2, 8
    %v30 = vld [vmem:[%s29] sm:$0xff]
    %v31 = vlaneseq
    %v32 = vshrl.u32 %v31, 7
    %v33 = vadd.s32 %v32, 8
    %vm34 = vcmp.lt.s32.totalorder %v33, 9
    %v35 = vsel %vm34, %v30, %v8
    %v36 = vlaneseq
    %v37 = vand.u32 %v36, 127
    %vm39 = vcmp.lt.s32.totalorder %v37, 16
    %v40 = vsel %vm39, %v35, %v8
    %s41 = scalar_lea.vmem [#allocation14], 8
    %s43 = ssub.s32 256, 1
    %44 = vst [vmem:[%s41] sm:%s43] %v40
    %v45 = vld [vmem:[%s0] sm:$0xff]
    %v46 = vlaneseq
    %v47 = vshrl.u32 %v46, 7
    %vm49 = vcmp.lt.s32.totalorder %v47, 9
    %v50 = vsel %vm49, %v45, %v9
    %v51 = vlaneseq
    %v52 = vand.u32 %v51, 127
    %vm54 = vcmp.lt.s32.totalorder %v52, 16
    %v55 = vsel %vm54, %v50, %v9
    %s57 = ssub.s32 256, 1
    %58 = vst [vmem:[#allocation15] sm:%s57] %v55
    %s59 = scalar_lea.vmem %s0, 8
    %v60 = vld [vmem:[%s59] sm:$0xff]
    %v61 = vlaneseq
    %v62 = vshrl.u32 %v61, 7
    %v63 = vadd.s32 %v62, 8
    %vm64 = vcmp.lt.s32.totalorder %v63, 9
    %v65 = vsel %vm64, %v60, %v9
    %v66 = vlaneseq
    %v67 = vand.u32 %v66, 127
    %vm69 = vcmp.lt.s32.totalorder %v67, 16
    %v70 = vsel %vm69, %v65, %v9
    %s71 = scalar_lea.vmem [#allocation15], 8
    %s73 = ssub.s32 256, 1
    %74 = vst [vmem:[%s71] sm:%s73] %v70
    %v75 = vld [vmem:[#allocation14] sm:$0xff]
    %v76 = vld [vmem:[#allocation14 + $0x8] sm:$0x1]
    %v77 = vld [vmem:[#allocation15] sm:$0xff]
    %v78 = vld [vmem:[#allocation15 + $0x8] sm:$0x1]
    %v79 = vmul.f32 %v75, %v77
    %v80 = vmul.f32 %v76, %v78
    %vm81 = vcmask 1040384
    %v82 = vsel %vm81, %v80, 0.0
    %v83 = vadd.f32 %v79, %v82
    %v84 = vrot.slane %v83, 4
    %v85 = vadd.f32 %v83, %v84
    %v86 = vrot.slane %v85, 2
    %v87 = vadd.f32 %v85, %v86
    %v88 = vrot.slane %v87, 1
    %v89 = vadd.f32 %v87, %v88
    %v90 = vsub.f32 %v89, 1.0
    %v91 = vmul.f32 %v90, 0.5
    %v92 = vmin.f32 %v91, 0.999999
    %v93 = vmax.f32 %v92, -0.999999
    %v94 = vand.u32 2147483647, %v93
    %v95 = vmul.f32 %v94, -0.0012624911
    %v96 = vadd.f32 %v95, 0.00667009
    %v97 = vmul.f32 %v96, %v94
    %v98 = vadd.f32 %v97, -0.017088126
    %v99 = vmul.f32 %v98, %v94
    %v100 = vadd.f32 %v99, 0.03089188
    %v101 = vmul.f32 %v100, %v94
    %v102 = vadd.f32 %v101, -0.050174303
    %v103 = vmul.f32 %v102, %v94
    %v104 = vadd.f32 %v103, 0.08897899
    %v105 = vmul.f32 %v104, %v94
    %v106 = vadd.f32 %v105, -0.2145988
    %v107 = vmul.f32 %v106, %v94
    %v108 = vadd.f32 %v107, 1.5707963
    %v109 = vsub.f32 1.0, %v94
    %v110 = vrsqrt.pop %v109
    %v111 = vmul.f32 %v110, %v109
    %v112 = vmul.f32 %v111, %v110
    %v113 = vmul.f32 0.5, %v112
    %v114 = vsub.f32 1.5, %v113
    %v115 = vmul.f32 %v110, %v114
    %v116 = vmul.f32 %v109, %v115
    %vm117 = vcmp.eq.f32.partialorder %v109, inf
    %v118 = vsel %vm117, %v109, %v116
    %vm119 = vcmp.eq.f32.partialorder %v109, 0.0
    %v120 = vand.u32 %v109, 2147483648
    %v121 = vsel %vm119, %v120, %v118
    %v122 = vmul.f32 %v108, %v121
    %vm123 = vcmp.lt.f32.partialorder %v93, 0.0
    %v124 = vsub.f32 3.1415927, %v122
    %v125 = vsel %vm123, %v124, %v122
    %s126 = smul.u32 0, 128
    %v127 = vlaneseq
    %v128 = vand.u32 %v127, 127
    %v129 = vstv %s126
    %v130 = vadd.s32 %v129, %v128
    %vm131 = vcmp.lt.s32.totalorder %v130, 16
    %v132 = vsel %vm131, %v125, 0.0
    %133 = vadd.xlane.f32.xlu0 %v132
    %v134 = vpop.xlane.xlu0 %133
    %135 = vst [vmem:[#allocation12] sm:$0x1] %v134
    // Predicated region
    $region10: #{geodesic_loss.2} parent=1 // pred_check
      _
    $region11: #{geodesic_loss.2} parent=1 // pred_check_branch
      %137 = sbr.rel (0) target = $region13
    $region12: #{geodesic_loss.2} parent=1 // pred_region
      %139 = vsyncadd [#allocation13], 0
      %s141 = sshll.u32 [#allocation12], 4
      %s142 = int_to_ptr.vmem [resolvable:$true] %s141
      %s143 = sshll.u32 %s3, 4
      %s144 = int_to_ptr.hbm [resolvable:$true] %s143
      %146 = dma.vmem_to_hbm [thread:$0]  %s142, 16, %s144, [#allocation13]
    $region13: #{geodesic_loss.2} parent=1 // pred_fallthru
      _
    // Predicated region
    $region14: #{geodesic_loss.2} parent=1 // pred_check
      _
    $region15: #{geodesic_loss.2} parent=1 // pred_check_branch
      %148 = sbr.rel (0) target = $region17
    $region16: #{geodesic_loss.2} parent=1 // pred_region
      %150 = dma.done [#allocation13], 16
    $region17: #{geodesic_loss.2} parent=1 // pred_fallthru
      _
    %151 = vsyncpa [#allocation13], 1

</llo_original>
